<compile_context>
chip_gen: v6e
topology: v6e:2x2x1
jax: 0.10.0
libtpu: 0.0.40
codegen_flags: <defaults>
</compile_context>

<pallas_src>
import jax
import jax.numpy as jnp
from jax.experimental import pallas as pl
from jax.experimental.pallas import tpu as pltpu

C_IN = 256
C_KEY = 128
C_VAL = 256
C_OUT = C_KEY + C_VAL          # 384 fused key+value output channels
TL_MAX = 1024                  # max L-tile (lanes); multiple of 128


def _kv_kernel(x_ref, w_ref, b_ref, k_ref, v_ref):
    # x_ref: (bb, 256, tl); w_ref: (384, 256) [bf16 by default]; b_ref: (384, 1) f32
    # k_ref: (bb, 128, tl); v_ref: (bb, 256, tl)
    bb = x_ref.shape[0]
    tl = x_ref.shape[-1]
    w = w_ref[...]                                            # resident weights
    # Hoist the bias lane-broadcast out of the batch loop (one splat per tile).
    bias = jnp.broadcast_to(b_ref[...], (C_OUT, tl))          # (384, tl) f32
    for i in range(bb):                                       # static unroll
        # In-kernel MXU-operand cast: no extra HBM convert pass for x.
        x = x_ref[i].astype(w.dtype)                          # (256, tl)
        out = jnp.dot(w, x, preferred_element_type=jnp.float32)   # (384, tl) f32
        out = out + bias
        k_ref[i] = out[:C_KEY, :].astype(k_ref.dtype)
        v_ref[i] = out[C_KEY:, :].astype(v_ref.dtype)


def _choose_tiles(B, L):
    """Pick (batch-block, L-tile) sizes. L-tile is a multiple of 128 or == L."""
    if L <= 128:
        # Short-L regime: outputs are narrower than a lane group anyway, so
        # amortize per-grid-step overhead by doing several batches per step.
        return min(B, 8), L
    tl = min(L, TL_MAX)
    # v7x megacore: make sure the grid has >= 2 parallel steps when possible.
    if B == 1 and L <= tl and L >= 256:
        tl = pl.cdiv(pl.cdiv(L, 2), 128) * 128
    return 1, tl


def spatial_key_value(x_ncl, wk, bk, wv, bv, *, use_bf16=True, out_dtype=None):
    """x_ncl: (B, 256, L). wk: (128, 256), bk: (128,), wv: (256, 256), bv: (256,).

    Returns (key, value) with shapes (B, 128, L), (B, 256, L) — the PyTorch
    Conv1d(kernel_size=1) outputs.  With use_bf16=True (default) the MXU runs
    on bf16 operands with f32 accumulation (~1e-2-level relative deviation
    from the f32 Conv1d).  out_dtype lets downstream consumers request bf16
    K/V stores; default keeps x's dtype.
    """
    B, C, L = x_ncl.shape
    assert C == C_IN
    if out_dtype is None:
        out_dtype = x_ncl.dtype

    bb, tl = _choose_tiles(B, L)
    grid = (pl.cdiv(B, bb), pl.cdiv(L, tl))

    # Fuse key/value heads into one weight / one bias (rows 0:128 = key head,
    # 128:384 = value head).  Pre-cast only the (tiny) weights; x is cast
    # per-tile inside the kernel.
    w_fused = jnp.concatenate([wk, wv], axis=0)               # (384, 256)
    if use_bf16:
        w_fused = w_fused.astype(jnp.bfloat16)
    b_fused = jnp.concatenate([bk, bv], axis=0).reshape(C_OUT, 1).astype(jnp.float32)

    in_bytes = (x_ncl.size * x_ncl.dtype.itemsize
                + w_fused.size * w_fused.dtype.itemsize
                + b_fused.size * b_fused.dtype.itemsize)
    out_bytes = B * L * C_OUT * jnp.dtype(out_dtype).itemsize
    cost = pl.CostEstimate(
        flops=2 * B * L * C_IN * C_OUT,
        transcendentals=0,
        bytes_accessed=in_bytes + out_bytes,
    )

    key, val = pl.pallas_call(
        _kv_kernel,
        out_shape=(
            jax.ShapeDtypeStruct((B, C_KEY, L), out_dtype),
            jax.ShapeDtypeStruct((B, C_VAL, L), out_dtype),
        ),
        grid_spec=pltpu.PrefetchScalarGridSpec(
            num_scalar_prefetch=0,
            grid=grid,
            in_specs=[
                pl.BlockSpec((bb, C_IN, tl), lambda bi, lj: (bi, 0, lj)),
                pl.BlockSpec((C_OUT, C_IN), lambda bi, lj: (0, 0)),
                pl.BlockSpec((C_OUT, 1), lambda bi, lj: (0, 0)),
            ],
            out_specs=[
                pl.BlockSpec((bb, C_KEY, tl), lambda bi, lj: (bi, 0, lj)),
                pl.BlockSpec((bb, C_VAL, tl), lambda bi, lj: (bi, 0, lj)),
            ],
        ),
        compiler_params=pltpu.CompilerParams(
            dimension_semantics=("parallel", "parallel"),
        ),
        cost_estimate=cost,
    )(x_ncl, w_fused, b_fused)
    return key, val


def _init_params(key):
    # Deterministic synthetic init mimicking nn.Conv1d default (uniform(-s, s),
    # s = 1/sqrt(fan_in)) with fan_in = 256 * kernel_size(=1).
    k1, k2, k3, k4 = jax.random.split(key, 4)
    s = 1.0 / jnp.sqrt(float(C_IN))
    wk = jax.random.uniform(k1, (C_KEY, C_IN), jnp.float32, -s, s)
    bk = jax.random.uniform(k2, (C_KEY,), jnp.float32, -s, s)
    wv = jax.random.uniform(k3, (C_VAL, C_IN), jnp.float32, -s, s)
    bv = jax.random.uniform(k4, (C_VAL,), jnp.float32, -s, s)
    return wk, bk, wv, bv


def _reference(x, wk, bk, wv, bv, use_bf16=True):
    # Pure-JAX reference (1x1 conv == channel matmul).  Applies the same bf16
    # operand rounding as the kernel so the f32-accumulate results match to
    # accumulation-order level.
    if use_bf16:
        x = x.astype(jnp.bfloat16).astype(jnp.float32)
        wk = wk.astype(jnp.bfloat16).astype(jnp.float32)
        wv = wv.astype(jnp.bfloat16).astype(jnp.float32)
    hi = jax.lax.Precision.HIGHEST
    rk = jnp.einsum("oc,bcl->bol", wk, x, precision=hi) + bk[None, :, None]
    rv = jnp.einsum("oc,bcl->bol", wv, x, precision=hi) + bv[None, :, None]
    return rk, rv


if __name__ == "__main__":
    root = jax.random.PRNGKey(0)
    kx, kp, kx2 = jax.random.split(root, 3)
    wk, bk, wv, bv = _init_params(kp)

    fn = jax.jit(spatial_key_value)

    # Case 1: small NCL demo shape (short-L / batched-per-step path).
    B, L = 2, 16
    x = jax.random.normal(kx, (B, C_IN, L), jnp.float32)
    key_out, val_out = fn(x, wk, bk, wv, bv)
    key_out = jax.block_until_ready(key_out)
    val_out = jax.block_until_ready(val_out)
    ref_key, ref_val = _reference(x, wk, bk, wv, bv)
    assert key_out.shape == (B, C_KEY, L)
    assert val_out.shape == (B, C_VAL, L)
    assert jnp.allclose(key_out, ref_key, atol=1e-3, rtol=1e-3)
    assert jnp.allclose(val_out, ref_val, atol=1e-3, rtol=1e-3)

    # Case 2: single-batch ragged-L shape (exercises the cdiv grid with edge
    # masking and the >=2-grid-step split for v7x megacore).
    B2, L2 = 1, 272
    x2 = jax.random.normal(kx2, (B2, C_IN, L2), jnp.float32)
    key2, val2 = fn(x2, wk, bk, wv, bv)
    key2 = jax.block_until_ready(key2)
    val2 = jax.block_until_ready(val2)
    ref_key2, ref_val2 = _reference(x2, wk, bk, wv, bv)
    assert key2.shape == (B2, C_KEY, L2)
    assert val2.shape == (B2, C_VAL, L2)
    assert jnp.allclose(key2, ref_key2, atol=1e-3, rtol=1e-3)
    assert jnp.allclose(val2, ref_val2, atol=1e-3, rtol=1e-3)

    print("KERNEL_OK")
</pallas_src>

<mosaic_0001>
module attributes {stable_mosaic.version = 11 : i64} {
  func.func @_kv_kernel(%arg0: i32, %arg1: i32, %arg2: memref<2x256x16xf32, #tpu.memory_space<vmem>>, %arg3: memref<384x256xbf16, #tpu.memory_space<vmem>>, %arg4: memref<384x1xf32, #tpu.memory_space<vmem>>, %arg5: memref<2x128x16xf32, #tpu.memory_space<vmem>>, %arg6: memref<2x256x16xf32, #tpu.memory_space<vmem>>) attributes {dimension_semantics = [#tpu.dimension_semantics<parallel>, #tpu.dimension_semantics<parallel>], iteration_bounds = array<i64: 1, 1>, scalar_prefetch = 0 : i64, scratch_operands = 0 : i64, tpu.core_type = #tpu.core_type<tc>, window_params = [{transform_indices = @transform_0, window_bounds = array<i64: 2, 256, 16>}, {pipeline_mode = #tpu.pipeline_mode<synchronous>, transform_indices = @transform_1, window_bounds = array<i64: 384, 256>}, {pipeline_mode = #tpu.pipeline_mode<synchronous>, transform_indices = @transform_2, window_bounds = array<i64: 384, 1>}, {transform_indices = @transform_3, window_bounds = array<i64: 2, 128, 16>}, {transform_indices = @transform_4, window_bounds = array<i64: 2, 256, 16>}]} {
    %c0 = arith.constant 0 : index
    %c0_0 = arith.constant 0 : index
    %0 = vector.load %arg3[%c0, %c0_0] : memref<384x256xbf16, #tpu.memory_space<vmem>>, vector<384x256xbf16>
    %c0_1 = arith.constant 0 : index
    %c0_2 = arith.constant 0 : index
    %1 = vector.load %arg4[%c0_1, %c0_2] : memref<384x1xf32, #tpu.memory_space<vmem>>, vector<384x1xf32>
    %2 = vector.shape_cast %1 : vector<384x1xf32> to vector<384x1xf32>
    %3 = vector.broadcast %2 : vector<384x1xf32> to vector<384x16xf32>
    %c0_3 = arith.constant 0 : index
    %c0_4 = arith.constant 0 : index
    %c0_5 = arith.constant 0 : index
    %4 = vector.load %arg2[%c0_3, %c0_4, %c0_5] : memref<2x256x16xf32, #tpu.memory_space<vmem>>, vector<1x256x16xf32>
    %5 = vector.shape_cast %4 : vector<1x256x16xf32> to vector<256x16xf32>
    %6 = arith.truncf %5 : vector<256x16xf32> to vector<256x16xbf16>
    %cst = arith.constant dense<0.000000e+00> : vector<384x16xf32>
    %7 = tpu.matmul %0, %6, %cst {dimension_numbers = #tpu.dot_dimension_numbers<[1], [0], [0], [1], [0, 0, 1, 1], [], []>} : vector<384x256xbf16>, vector<256x16xbf16>, vector<384x16xf32> -> vector<384x16xf32>
    %8 = arith.addf %7, %3 : vector<384x16xf32>
    %9 = vector.extract_strided_slice %8 {offsets = [0, 0], sizes = [128, 16], strides = [1, 1]} : vector<384x16xf32> to vector<128x16xf32>
    %c0_6 = arith.constant 0 : index
    %c0_7 = arith.constant 0 : index
    %c0_8 = arith.constant 0 : index
    %10 = vector.load %arg5[%c0_6, %c0_7, %c0_8] : memref<2x128x16xf32, #tpu.memory_space<vmem>>, vector<1x128x16xf32>
    %11 = vector.shape_cast %10 : vector<1x128x16xf32> to vector<128x16xf32>
    %12 = vector.shape_cast %9 : vector<128x16xf32> to vector<1x128x16xf32>
    tpu.vector_store %arg5[%c0_6, %c0_7, %c0_8], %12 {strides = array<i32>} : memref<2x128x16xf32, #tpu.memory_space<vmem>>, vector<1x128x16xf32>,
    %13 = vector.extract_strided_slice %8 {offsets = [128, 0], sizes = [256, 16], strides = [1, 1]} : vector<384x16xf32> to vector<256x16xf32>
    %c0_9 = arith.constant 0 : index
    %c0_10 = arith.constant 0 : index
    %c0_11 = arith.constant 0 : index
    %14 = vector.load %arg6[%c0_9, %c0_10, %c0_11] : memref<2x256x16xf32, #tpu.memory_space<vmem>>, vector<1x256x16xf32>
    %15 = vector.shape_cast %14 : vector<1x256x16xf32> to vector<256x16xf32>
    %16 = vector.shape_cast %13 : vector<256x16xf32> to vector<1x256x16xf32>
    tpu.vector_store %arg6[%c0_9, %c0_10, %c0_11], %16 {strides = array<i32>} : memref<2x256x16xf32, #tpu.memory_space<vmem>>, vector<1x256x16xf32>,
    %c1 = arith.constant 1 : index
    %c0_12 = arith.constant 0 : index
    %c0_13 = arith.constant 0 : index
    %17 = vector.load %arg2[%c1, %c0_12, %c0_13] : memref<2x256x16xf32, #tpu.memory_space<vmem>>, vector<1x256x16xf32>
    %18 = vector.shape_cast %17 : vector<1x256x16xf32> to vector<256x16xf32>
    %19 = arith.truncf %18 : vector<256x16xf32> to vector<256x16xbf16>
    %cst_14 = arith.constant dense<0.000000e+00> : vector<384x16xf32>
    %20 = tpu.matmul %0, %19, %cst_14 {dimension_numbers = #tpu.dot_dimension_numbers<[1], [0], [0], [1], [0, 0, 1, 1], [], []>} : vector<384x256xbf16>, vector<256x16xbf16>, vector<384x16xf32> -> vector<384x16xf32>
    %21 = arith.addf %20, %3 : vector<384x16xf32>
    %22 = vector.extract_strided_slice %21 {offsets = [0, 0], sizes = [128, 16], strides = [1, 1]} : vector<384x16xf32> to vector<128x16xf32>
    %c1_15 = arith.constant 1 : index
    %c0_16 = arith.constant 0 : index
    %c0_17 = arith.constant 0 : index
    %23 = vector.load %arg5[%c1_15, %c0_16, %c0_17] : memref<2x128x16xf32, #tpu.memory_space<vmem>>, vector<1x128x16xf32>
    %24 = vector.shape_cast %23 : vector<1x128x16xf32> to vector<128x16xf32>
    %25 = vector.shape_cast %22 : vector<128x16xf32> to vector<1x128x16xf32>
    tpu.vector_store %arg5[%c1_15, %c0_16, %c0_17], %25 {strides = array<i32>} : memref<2x128x16xf32, #tpu.memory_space<vmem>>, vector<1x128x16xf32>,
    %26 = vector.extract_strided_slice %21 {offsets = [128, 0], sizes = [256, 16], strides = [1, 1]} : vector<384x16xf32> to vector<256x16xf32>
    %c1_18 = arith.constant 1 : index
    %c0_19 = arith.constant 0 : index
    %c0_20 = arith.constant 0 : index
    %27 = vector.load %arg6[%c1_18, %c0_19, %c0_20] : memref<2x256x16xf32, #tpu.memory_space<vmem>>, vector<1x256x16xf32>
    %28 = vector.shape_cast %27 : vector<1x256x16xf32> to vector<256x16xf32>
    %29 = vector.shape_cast %26 : vector<256x16xf32> to vector<1x256x16xf32>
    tpu.vector_store %arg6[%c1_18, %c0_19, %c0_20], %29 {strides = array<i32>} : memref<2x256x16xf32, #tpu.memory_space<vmem>>, vector<1x256x16xf32>,
    return
  }
  func.func @transform_0(%arg0: i32, %arg1: i32) -> (i32, i32, i32) {
    %c0_i32 = arith.constant 0 : i32
    %c0_i32_0 = arith.constant 0 : i32
    return %arg0, %c0_i32, %arg1 : i32, i32, i32
  }
  func.func @transform_1(%arg0: i32, %arg1: i32) -> (i32, i32) {
    %c0_i32 = arith.constant 0 : i32
    %c0_i32_0 = arith.constant 0 : i32
    %c0_i32_1 = arith.constant 0 : i32
    return %c0_i32, %c0_i32_0 : i32, i32
  }
  func.func @transform_2(%arg0: i32, %arg1: i32) -> (i32, i32) {
    %c0_i32 = arith.constant 0 : i32
    %c0_i32_0 = arith.constant 0 : i32
    %c0_i32_1 = arith.constant 0 : i32
    return %c0_i32, %c0_i32_0 : i32, i32
  }
  func.func @transform_3(%arg0: i32, %arg1: i32) -> (i32, i32, i32) {
    %c0_i32 = arith.constant 0 : i32
    %c0_i32_0 = arith.constant 0 : i32
    return %arg0, %c0_i32, %arg1 : i32, i32, i32
  }
  func.func @transform_4(%arg0: i32, %arg1: i32) -> (i32, i32, i32) {
    %c0_i32 = arith.constant 0 : i32
    %c0_i32_0 = arith.constant 0 : i32
    return %arg0, %c0_i32, %arg1 : i32, i32, i32
  }
}

</mosaic_0001>

<llo_original>
// kernel: spatial_key_value.1
$region0: #{spatial_key_value.1}
  #allocation0 [shape = 'u32[]', space=smem, size = 0x4, offset = 0x4, fixed_abs, tag = 'smem constant byte address 0x4 - core index']
  #allocation1 [shape = 'u32[144,128]{1,0:T(1,128)}', space=vmem, size = 0x12000, scoped, tag = 'internal scratch']
  %s0 = inlined_call_operand.vmem [shape: f32[2,256,16], index: 0, kind: input, shape index: {}]
  %s1 = inlined_call_operand.vmem [shape: bf16[384,256], index: 1, kind: input, shape index: {}]
  %s2 = inlined_call_operand.vmem [shape: f32[384,1], index: 2, kind: input, shape index: {}]
  %s3 = inlined_call_operand.vmem [shape: f32[2,128,16], index: 3, kind: output, shape index: {0}]
  %s4 = inlined_call_operand.vmem [shape: f32[2,256,16], index: 4, kind: output, shape index: {1}]
  %5 = xla_tuple %s3, %s4
  %s6 = sld [smem:[#allocation0]]
  $region30: #{spatial_key_value.1} parent=0
    _
  %s8 = ssub.s32 1, %s6
  %s9 = scalar_select 0, %s8, %s6
  // Predicated region
  $region2: #{spatial_key_value.1} parent=0 // pred_check
    _
  $region3: #{spatial_key_value.1} parent=0 // pred_check_branch
    %11 = sbr.rel (0) target = $region5
  $region4: #{spatial_key_value.1} parent=0 // pred_region
    _
  $region5: #{spatial_key_value.1} parent=0 // pred_fallthru
    _
  // Predicated region
  $region6: #{spatial_key_value.1} parent=0 // pred_check
    _
  $region7: #{spatial_key_value.1} parent=0 // pred_check_branch
    %13 = sbr.rel (0) target = $region9
  $region8: #{spatial_key_value.1} parent=0 // pred_region
    _
  $region9: #{spatial_key_value.1} parent=0 // pred_fallthru
    _
  // Predicated region
  $region10: #{spatial_key_value.1} parent=0 // pred_check
    _
  $region11: #{spatial_key_value.1} parent=0 // pred_check_branch
    %15 = sbr.rel (0) target = $region13
  $region12: #{spatial_key_value.1} parent=0 // pred_region
    _
  $region13: #{spatial_key_value.1} parent=0 // pred_fallthru
    _
  %v17 = vld [vmem:[%s1] sm:$0xff]
  %v18 = vld [vmem:[%s1 + $0x8] sm:$0xff]
  %v19 = vld [vmem:[%s1 + $0x10] sm:$0xff]
  %v20 = vld [vmem:[%s1 + $0x18] sm:$0xff]
  %v21 = vld [vmem:[%s1 + $0x20] sm:$0xff]
  %v22 = vld [vmem:[%s1 + $0x28] sm:$0xff]
  %v23 = vld [vmem:[%s1 + $0x30] sm:$0xff]
  %v24 = vld [vmem:[%s1 + $0x38] sm:$0xff]
  %v25 = vld [vmem:[%s1 + $0x40] sm:$0xff]
  %v26 = vld [vmem:[%s1 + $0x48] sm:$0xff]
  %v27 = vld [vmem:[%s1 + $0x50] sm:$0xff]
  %v28 = vld [vmem:[%s1 + $0x58] sm:$0xff]
  %v29 = vld [vmem:[%s1 + $0x60] sm:$0xff]
  %v30 = vld [vmem:[%s1 + $0x68] sm:$0xff]
  %v31 = vld [vmem:[%s1 + $0x70] sm:$0xff]
  %v32 = vld [vmem:[%s1 + $0x78] sm:$0xff]
  %v33 = vld [vmem:[%s1 + $0x80] sm:$0xff]
  %v34 = vld [vmem:[%s1 + $0x88] sm:$0xff]
  %v35 = vld [vmem:[%s1 + $0x90] sm:$0xff]
  %v36 = vld [vmem:[%s1 + $0x98] sm:$0xff]
  %v37 = vld [vmem:[%s1 + $0xa0] sm:$0xff]
  %v38 = vld [vmem:[%s1 + $0xa8] sm:$0xff]
  %v39 = vld [vmem:[%s1 + $0xb0] sm:$0xff]
  %v40 = vld [vmem:[%s1 + $0xb8] sm:$0xff]
  %v41 = vld [vmem:[%s1 + $0xc0] sm:$0xff]
  %v42 = vld [vmem:[%s1 + $0xc8] sm:$0xff]
  %v43 = vld [vmem:[%s1 + $0xd0] sm:$0xff]
  %v44 = vld [vmem:[%s1 + $0xd8] sm:$0xff]
  %v45 = vld [vmem:[%s1 + $0xe0] sm:$0xff]
  %v46 = vld [vmem:[%s1 + $0xe8] sm:$0xff]
  %v47 = vld [vmem:[%s1 + $0xf0] sm:$0xff]
  %v48 = vld [vmem:[%s1 + $0xf8] sm:$0xff]
  %v49 = vld [vmem:[%s1 + $0x100] sm:$0xff]
  %v50 = vld [vmem:[%s1 + $0x108] sm:$0xff]
  %v51 = vld [vmem:[%s1 + $0x110] sm:$0xff]
  %v52 = vld [vmem:[%s1 + $0x118] sm:$0xff]
  %v53 = vld [vmem:[%s1 + $0x120] sm:$0xff]
  %v54 = vld [vmem:[%s1 + $0x128] sm:$0xff]
  %v55 = vld [vmem:[%s1 + $0x130] sm:$0xff]
  %v56 = vld [vmem:[%s1 + $0x138] sm:$0xff]
  %v57 = vld [vmem:[%s1 + $0x140] sm:$0xff]
  %v58 = vld [vmem:[%s1 + $0x148] sm:$0xff]
  %v59 = vld [vmem:[%s1 + $0x150] sm:$0xff]
  %v60 = vld [vmem:[%s1 + $0x158] sm:$0xff]
  %v61 = vld [vmem:[%s1 + $0x160] sm:$0xff]
  %v62 = vld [vmem:[%s1 + $0x168] sm:$0xff]
  %v63 = vld [vmem:[%s1 + $0x170] sm:$0xff]
  %v64 = vld [vmem:[%s1 + $0x178] sm:$0xff]
  %v65 = vld [vmem:[%s2] sm:$0xff]
  %v66 = vld [vmem:[%s2 + $0x8] sm:$0xff]
  %v67 = vld [vmem:[%s2 + $0x10] sm:$0xff]
  %v68 = vld [vmem:[%s2 + $0x18] sm:$0xff]
  %v69 = vld [vmem:[%s2 + $0x20] sm:$0xff]
  %v70 = vld [vmem:[%s2 + $0x28] sm:$0xff]
  %v71 = vld [vmem:[%s2 + $0x30] sm:$0xff]
  %v72 = vld [vmem:[%s2 + $0x38] sm:$0xff]
  %v73 = vld [vmem:[%s2 + $0x40] sm:$0xff]
  %v74 = vld [vmem:[%s2 + $0x48] sm:$0xff]
  %v75 = vld [vmem:[%s2 + $0x50] sm:$0xff]
  %v76 = vld [vmem:[%s2 + $0x58] sm:$0xff]
  %v77 = vld [vmem:[%s2 + $0x60] sm:$0xff]
  %v78 = vld [vmem:[%s2 + $0x68] sm:$0xff]
  %v79 = vld [vmem:[%s2 + $0x70] sm:$0xff]
  %v80 = vld [vmem:[%s2 + $0x78] sm:$0xff]
  %v81 = vld [vmem:[%s2 + $0x80] sm:$0xff]
  %v82 = vld [vmem:[%s2 + $0x88] sm:$0xff]
  %v83 = vld [vmem:[%s2 + $0x90] sm:$0xff]
  %v84 = vld [vmem:[%s2 + $0x98] sm:$0xff]
  %v85 = vld [vmem:[%s2 + $0xa0] sm:$0xff]
  %v86 = vld [vmem:[%s2 + $0xa8] sm:$0xff]
  %v87 = vld [vmem:[%s2 + $0xb0] sm:$0xff]
  %v88 = vld [vmem:[%s2 + $0xb8] sm:$0xff]
  %v89 = vld [vmem:[%s2 + $0xc0] sm:$0xff]
  %v90 = vld [vmem:[%s2 + $0xc8] sm:$0xff]
  %v91 = vld [vmem:[%s2 + $0xd0] sm:$0xff]
  %v92 = vld [vmem:[%s2 + $0xd8] sm:$0xff]
  %v93 = vld [vmem:[%s2 + $0xe0] sm:$0xff]
  %v94 = vld [vmem:[%s2 + $0xe8] sm:$0xff]
  %v95 = vld [vmem:[%s2 + $0xf0] sm:$0xff]
  %v96 = vld [vmem:[%s2 + $0xf8] sm:$0xff]
  %v97 = vld [vmem:[%s2 + $0x100] sm:$0xff]
  %v98 = vld [vmem:[%s2 + $0x108] sm:$0xff]
  %v99 = vld [vmem:[%s2 + $0x110] sm:$0xff]
  %v100 = vld [vmem:[%s2 + $0x118] sm:$0xff]
  %v101 = vld [vmem:[%s2 + $0x120] sm:$0xff]
  %v102 = vld [vmem:[%s2 + $0x128] sm:$0xff]
  %v103 = vld [vmem:[%s2 + $0x130] sm:$0xff]
  %v104 = vld [vmem:[%s2 + $0x138] sm:$0xff]
  %v105 = vld [vmem:[%s2 + $0x140] sm:$0xff]
  %v106 = vld [vmem:[%s2 + $0x148] sm:$0xff]
  %v107 = vld [vmem:[%s2 + $0x150] sm:$0xff]
  %v108 = vld [vmem:[%s2 + $0x158] sm:$0xff]
  %v109 = vld [vmem:[%s2 + $0x160] sm:$0xff]
  %v110 = vld [vmem:[%s2 + $0x168] sm:$0xff]
  %v111 = vld [vmem:[%s2 + $0x170] sm:$0xff]
  %v112 = vld [vmem:[%s2 + $0x178] sm:$0xff]
  %114 = vset.pattern.permute.xlu0 0
  %115 = vperm.xlu0 %114, %v65
  %v116 = vpop.permute.xlu0 %115
  %119 = vset.pattern.permute.xlu0 0
  %120 = vperm.xlu0 %119, %v66
  %v121 = vpop.permute.xlu0 %120
  %124 = vset.pattern.permute.xlu0 0
  %125 = vperm.xlu0 %124, %v67
  %v126 = vpop.permute.xlu0 %125
  %129 = vset.pattern.permute.xlu0 0
  %130 = vperm.xlu0 %129, %v68
  %v131 = vpop.permute.xlu0 %130
  %134 = vset.pattern.permute.xlu0 0
  %135 = vperm.xlu0 %134, %v69
  %v136 = vpop.permute.xlu0 %135
  %139 = vset.pattern.permute.xlu0 0
  %140 = vperm.xlu0 %139, %v70
  %v141 = vpop.permute.xlu0 %140
  %144 = vset.pattern.permute.xlu0 0
  %145 = vperm.xlu0 %144, %v71
  %v146 = vpop.permute.xlu0 %145
  %149 = vset.pattern.permute.xlu0 0
  %150 = vperm.xlu0 %149, %v72
  %v151 = vpop.permute.xlu0 %150
  %154 = vset.pattern.permute.xlu0 0
  %155 = vperm.xlu0 %154, %v73
  %v156 = vpop.permute.xlu0 %155
  %159 = vset.pattern.permute.xlu0 0
  %160 = vperm.xlu0 %159, %v74
  %v161 = vpop.permute.xlu0 %160
  %164 = vset.pattern.permute.xlu0 0
  %165 = vperm.xlu0 %164, %v75
  %v166 = vpop.permute.xlu0 %165
  %169 = vset.pattern.permute.xlu0 0
  %170 = vperm.xlu0 %169, %v76
  %v171 = vpop.permute.xlu0 %170
  %174 = vset.pattern.permute.xlu0 0
  %175 = vperm.xlu0 %174, %v77
  %v176 = vpop.permute.xlu0 %175
  %179 = vset.pattern.permute.xlu0 0
  %180 = vperm.xlu0 %179, %v78
  %v181 = vpop.permute.xlu0 %180
  %184 = vset.pattern.permute.xlu0 0
  %185 = vperm.xlu0 %184, %v79
  %v186 = vpop.permute.xlu0 %185
  %189 = vset.pattern.permute.xlu0 0
  %190 = vperm.xlu0 %189, %v80
  %v191 = vpop.permute.xlu0 %190
  %194 = vset.pattern.permute.xlu0 0
  %195 = vperm.xlu0 %194, %v81
  %v196 = vpop.permute.xlu0 %195
  %199 = vset.pattern.permute.xlu0 0
  %200 = vperm.xlu0 %199, %v82
  %v201 = vpop.permute.xlu0 %200
  %204 = vset.pattern.permute.xlu0 0
  %205 = vperm.xlu0 %204, %v83
  %v206 = vpop.permute.xlu0 %205
  %209 = vset.pattern.permute.xlu0 0
  %210 = vperm.xlu0 %209, %v84
  %v211 = vpop.permute.xlu0 %210
  %214 = vset.pattern.permute.xlu0 0
  %215 = vperm.xlu0 %214, %v85
  %v216 = vpop.permute.xlu0 %215
  %219 = vset.pattern.permute.xlu0 0
  %220 = vperm.xlu0 %219, %v86
  %v221 = vpop.permute.xlu0 %220
  %224 = vset.pattern.permute.xlu0 0
  %225 = vperm.xlu0 %224, %v87
  %v226 = vpop.permute.xlu0 %225
  %229 = vset.pattern.permute.xlu0 0
  %230 = vperm.xlu0 %229, %v88
  %v231 = vpop.permute.xlu0 %230
  %234 = vset.pattern.permute.xlu0 0
  %235 = vperm.xlu0 %234, %v89
  %v236 = vpop.permute.xlu0 %235
  %239 = vset.pattern.permute.xlu0 0
  %240 = vperm.xlu0 %239, %v90
  %v241 = vpop.permute.xlu0 %240
  %244 = vset.pattern.permute.xlu0 0
  %245 = vperm.xlu0 %244, %v91
  %v246 = vpop.permute.xlu0 %245
  %249 = vset.pattern.permute.xlu0 0
  %250 = vperm.xlu0 %249, %v92
  %v251 = vpop.permute.xlu0 %250
  %254 = vset.pattern.permute.xlu0 0
  %255 = vperm.xlu0 %254, %v93
  %v256 = vpop.permute.xlu0 %255
  %259 = vset.pattern.permute.xlu0 0
  %260 = vperm.xlu0 %259, %v94
  %v261 = vpop.permute.xlu0 %260
  %264 = vset.pattern.permute.xlu0 0
  %265 = vperm.xlu0 %264, %v95
  %v266 = vpop.permute.xlu0 %265
  %269 = vset.pattern.permute.xlu0 0
  %270 = vperm.xlu0 %269, %v96
  %v271 = vpop.permute.xlu0 %270
  %274 = vset.pattern.permute.xlu0 0
  %275 = vperm.xlu0 %274, %v97
  %v276 = vpop.permute.xlu0 %275
  %279 = vset.pattern.permute.xlu0 0
  %280 = vperm.xlu0 %279, %v98
  %v281 = vpop.permute.xlu0 %280
  %284 = vset.pattern.permute.xlu0 0
  %285 = vperm.xlu0 %284, %v99
  %v286 = vpop.permute.xlu0 %285
  %289 = vset.pattern.permute.xlu0 0
  %290 = vperm.xlu0 %289, %v100
  %v291 = vpop.permute.xlu0 %290
  %294 = vset.pattern.permute.xlu0 0
  %295 = vperm.xlu0 %294, %v101
  %v296 = vpop.permute.xlu0 %295
  %299 = vset.pattern.permute.xlu0 0
  %300 = vperm.xlu0 %299, %v102
  %v301 = vpop.permute.xlu0 %300
  %304 = vset.pattern.permute.xlu0 0
  %305 = vperm.xlu0 %304, %v103
  %v306 = vpop.permute.xlu0 %305
  %309 = vset.pattern.permute.xlu0 0
  %310 = vperm.xlu0 %309, %v104
  %v311 = vpop.permute.xlu0 %310
  %314 = vset.pattern.permute.xlu0 0
  %315 = vperm.xlu0 %314, %v105
  %v316 = vpop.permute.xlu0 %315
  %319 = vset.pattern.permute.xlu0 0
  %320 = vperm.xlu0 %319, %v106
  %v321 = vpop.permute.xlu0 %320
  %324 = vset.pattern.permute.xlu0 0
  %325 = vperm.xlu0 %324, %v107
  %v326 = vpop.permute.xlu0 %325
  %329 = vset.pattern.permute.xlu0 0
  %330 = vperm.xlu0 %329, %v108
  %v331 = vpop.permute.xlu0 %330
  %334 = vset.pattern.permute.xlu0 0
  %335 = vperm.xlu0 %334, %v109
  %v336 = vpop.permute.xlu0 %335
  %339 = vset.pattern.permute.xlu0 0
  %340 = vperm.xlu0 %339, %v110
  %v341 = vpop.permute.xlu0 %340
  %344 = vset.pattern.permute.xlu0 0
  %345 = vperm.xlu0 %344, %v111
  %v346 = vpop.permute.xlu0 %345
  %349 = vset.pattern.permute.xlu0 0
  %350 = vperm.xlu0 %349, %v112
  %v351 = vpop.permute.xlu0 %350
  %v353 = vld [vmem:[%s0] sm:$0xff]
  %v354 = vld [vmem:[%s0 + $0x8] sm:$0xff]
  %v355 = vld [vmem:[%s0 + $0x10] sm:$0xff]
  %v356 = vld [vmem:[%s0 + $0x18] sm:$0xff]
  %v357 = vld [vmem:[%s0 + $0x20] sm:$0xff]
  %v358 = vld [vmem:[%s0 + $0x28] sm:$0xff]
  %v359 = vld [vmem:[%s0 + $0x30] sm:$0xff]
  %v360 = vld [vmem:[%s0 + $0x38] sm:$0xff]
  %v361 = vld [vmem:[%s0 + $0x40] sm:$0xff]
  %v362 = vld [vmem:[%s0 + $0x48] sm:$0xff]
  %v363 = vld [vmem:[%s0 + $0x50] sm:$0xff]
  %v364 = vld [vmem:[%s0 + $0x58] sm:$0xff]
  %v365 = vld [vmem:[%s0 + $0x60] sm:$0xff]
  %v366 = vld [vmem:[%s0 + $0x68] sm:$0xff]
  %v367 = vld [vmem:[%s0 + $0x70] sm:$0xff]
  %v368 = vld [vmem:[%s0 + $0x78] sm:$0xff]
  %v369 = vld [vmem:[%s0 + $0x80] sm:$0xff]
  %v370 = vld [vmem:[%s0 + $0x88] sm:$0xff]
  %v371 = vld [vmem:[%s0 + $0x90] sm:$0xff]
  %v372 = vld [vmem:[%s0 + $0x98] sm:$0xff]
  %v373 = vld [vmem:[%s0 + $0xa0] sm:$0xff]
  %v374 = vld [vmem:[%s0 + $0xa8] sm:$0xff]
  %v375 = vld [vmem:[%s0 + $0xb0] sm:$0xff]
  %v376 = vld [vmem:[%s0 + $0xb8] sm:$0xff]
  %v377 = vld [vmem:[%s0 + $0xc0] sm:$0xff]
  %v378 = vld [vmem:[%s0 + $0xc8] sm:$0xff]
  %v379 = vld [vmem:[%s0 + $0xd0] sm:$0xff]
  %v380 = vld [vmem:[%s0 + $0xd8] sm:$0xff]
  %v381 = vld [vmem:[%s0 + $0xe0] sm:$0xff]
  %v382 = vld [vmem:[%s0 + $0xe8] sm:$0xff]
  %v383 = vld [vmem:[%s0 + $0xf0] sm:$0xff]
  %v384 = vld [vmem:[%s0 + $0xf8] sm:$0xff]
  %v385 = vpack.c.bf16 %v354, %v353
  %v386 = vpack.c.bf16 %v356, %v355
  %v387 = vpack.c.bf16 %v358, %v357
  %v388 = vpack.c.bf16 %v360, %v359
  %v389 = vpack.c.bf16 %v362, %v361
  %v390 = vpack.c.bf16 %v364, %v363
  %v391 = vpack.c.bf16 %v366, %v365
  %v392 = vpack.c.bf16 %v368, %v367
  %v393 = vpack.c.bf16 %v370, %v369
  %v394 = vpack.c.bf16 %v372, %v371
  %v395 = vpack.c.bf16 %v374, %v373
  %v396 = vpack.c.bf16 %v376, %v375
  %v397 = vpack.c.bf16 %v378, %v377
  %v398 = vpack.c.bf16 %v380, %v379
  %v399 = vpack.c.bf16 %v382, %v381
  %v400 = vpack.c.bf16 %v384, %v383
  %v449 = vunpack.c.l.b16 %v17
  %v450 = vunpack.c.h.b16 %v17
  %v451 = vunpack.c.l.b16 %v18
  %v452 = vunpack.c.h.b16 %v18
  %v453 = vunpack.c.l.b16 %v19
  %v454 = vunpack.c.h.b16 %v19
  %v455 = vunpack.c.l.b16 %v20
  %v456 = vunpack.c.h.b16 %v20
  %v457 = vunpack.c.l.b16 %v21
  %v458 = vunpack.c.h.b16 %v21
  %v459 = vunpack.c.l.b16 %v22
  %v460 = vunpack.c.h.b16 %v22
  %v461 = vunpack.c.l.b16 %v23
  %v462 = vunpack.c.h.b16 %v23
  %v463 = vunpack.c.l.b16 %v24
  %v464 = vunpack.c.h.b16 %v24
  %v465 = vunpack.c.l.b16 %v25
  %v466 = vunpack.c.h.b16 %v25
  %v467 = vunpack.c.l.b16 %v26
  %v468 = vunpack.c.h.b16 %v26
  %v469 = vunpack.c.l.b16 %v27
  %v470 = vunpack.c.h.b16 %v27
  %v471 = vunpack.c.l.b16 %v28
  %v472 = vunpack.c.h.b16 %v28
  %v473 = vunpack.c.l.b16 %v29
  %v474 = vunpack.c.h.b16 %v29
  %v475 = vunpack.c.l.b16 %v30
  %v476 = vunpack.c.h.b16 %v30
  %v477 = vunpack.c.l.b16 %v31
  %v478 = vunpack.c.h.b16 %v31
  %v479 = vunpack.c.l.b16 %v32
  %v480 = vunpack.c.h.b16 %v32
  %v481 = vunpack.c.l.b16 %v33
  %v482 = vunpack.c.h.b16 %v33
  %v483 = vunpack.c.l.b16 %v34
  %v484 = vunpack.c.h.b16 %v34
  %v485 = vunpack.c.l.b16 %v35
  %v486 = vunpack.c.h.b16 %v35
  %v487 = vunpack.c.l.b16 %v36
  %v488 = vunpack.c.h.b16 %v36
  %v489 = vunpack.c.l.b16 %v37
  %v490 = vunpack.c.h.b16 %v37
  %v491 = vunpack.c.l.b16 %v38
  %v492 = vunpack.c.h.b16 %v38
  %v493 = vunpack.c.l.b16 %v39
  %v494 = vunpack.c.h.b16 %v39
  %v495 = vunpack.c.l.b16 %v40
  %v496 = vunpack.c.h.b16 %v40
  %v497 = vunpack.c.l.b16 %v41
  %v498 = vunpack.c.h.b16 %v41
  %v499 = vunpack.c.l.b16 %v42
  %v500 = vunpack.c.h.b16 %v42
  %v501 = vunpack.c.l.b16 %v43
  %v502 = vunpack.c.h.b16 %v43
  %v503 = vunpack.c.l.b16 %v44
  %v504 = vunpack.c.h.b16 %v44
  %v505 = vunpack.c.l.b16 %v45
  %v506 = vunpack.c.h.b16 %v45
  %v507 = vunpack.c.l.b16 %v46
  %v508 = vunpack.c.h.b16 %v46
  %v509 = vunpack.c.l.b16 %v47
  %v510 = vunpack.c.h.b16 %v47
  %v511 = vunpack.c.l.b16 %v48
  %v512 = vunpack.c.h.b16 %v48
  %v513 = vunpack.c.l.b16 %v49
  %v514 = vunpack.c.h.b16 %v49
  %v515 = vunpack.c.l.b16 %v50
  %v516 = vunpack.c.h.b16 %v50
  %v517 = vunpack.c.l.b16 %v51
  %v518 = vunpack.c.h.b16 %v51
  %v519 = vunpack.c.l.b16 %v52
  %v520 = vunpack.c.h.b16 %v52
  %v521 = vunpack.c.l.b16 %v53
  %v522 = vunpack.c.h.b16 %v53
  %v523 = vunpack.c.l.b16 %v54
  %v524 = vunpack.c.h.b16 %v54
  %v525 = vunpack.c.l.b16 %v55
  %v526 = vunpack.c.h.b16 %v55
  %v527 = vunpack.c.l.b16 %v56
  %v528 = vunpack.c.h.b16 %v56
  %v529 = vunpack.c.l.b16 %v57
  %v530 = vunpack.c.h.b16 %v57
  %v531 = vunpack.c.l.b16 %v58
  %v532 = vunpack.c.h.b16 %v58
  %v533 = vunpack.c.l.b16 %v59
  %v534 = vunpack.c.h.b16 %v59
  %v535 = vunpack.c.l.b16 %v60
  %v536 = vunpack.c.h.b16 %v60
  %v537 = vunpack.c.l.b16 %v61
  %v538 = vunpack.c.h.b16 %v61
  %v539 = vunpack.c.l.b16 %v62
  %v540 = vunpack.c.h.b16 %v62
  %v541 = vunpack.c.l.b16 %v63
  %v542 = vunpack.c.h.b16 %v63
  %v543 = vunpack.c.l.b16 %v64
  %v544 = vunpack.c.h.b16 %v64
  %v545 = vpack.c.b16 %v451, %v449
  %v546 = vpack.c.b16 %v452, %v450
  %v547 = vpack.c.b16 %v455, %v453
  %v548 = vpack.c.b16 %v456, %v454
  %v549 = vpack.c.b16 %v459, %v457
  %v550 = vpack.c.b16 %v460, %v458
  %v551 = vpack.c.b16 %v463, %v461
  %v552 = vpack.c.b16 %v464, %v462
  %v553 = vpack.c.b16 %v467, %v465
  %v554 = vpack.c.b16 %v468, %v466
  %v555 = vpack.c.b16 %v471, %v469
  %v556 = vpack.c.b16 %v472, %v470
  %v557 = vpack.c.b16 %v475, %v473
  %v558 = vpack.c.b16 %v476, %v474
  %v559 = vpack.c.b16 %v479, %v477
  %v560 = vpack.c.b16 %v480, %v478
  %v561 = vpack.c.b16 %v483, %v481
  %v562 = vpack.c.b16 %v484, %v482
  %v563 = vpack.c.b16 %v487, %v485
  %v564 = vpack.c.b16 %v488, %v486
  %v565 = vpack.c.b16 %v491, %v489
  %v566 = vpack.c.b16 %v492, %v490
  %v567 = vpack.c.b16 %v495, %v493
  %v568 = vpack.c.b16 %v496, %v494
  %v569 = vpack.c.b16 %v499, %v497
  %v570 = vpack.c.b16 %v500, %v498
  %v571 = vpack.c.b16 %v503, %v501
  %v572 = vpack.c.b16 %v504, %v502
  %v573 = vpack.c.b16 %v507, %v505
  %v574 = vpack.c.b16 %v508, %v506
  %v575 = vpack.c.b16 %v511, %v509
  %v576 = vpack.c.b16 %v512, %v510
  %v577 = vpack.c.b16 %v515, %v513
  %v578 = vpack.c.b16 %v516, %v514
  %v579 = vpack.c.b16 %v519, %v517
  %v580 = vpack.c.b16 %v520, %v518
  %v581 = vpack.c.b16 %v523, %v521
  %v582 = vpack.c.b16 %v524, %v522
  %v583 = vpack.c.b16 %v527, %v525
  %v584 = vpack.c.b16 %v528, %v526
  %v585 = vpack.c.b16 %v531, %v529
  %v586 = vpack.c.b16 %v532, %v530
  %v587 = vpack.c.b16 %v535, %v533
  %v588 = vpack.c.b16 %v536, %v534
  %v589 = vpack.c.b16 %v539, %v537
  %v590 = vpack.c.b16 %v540, %v538
  %v591 = vpack.c.b16 %v543, %v541
  %v592 = vpack.c.b16 %v544, %v542
  %641 = vmatprep.subr.bf16.mxu0 0
  %642 = vmatpush1.bf16.msra.mxu0 %v392
  %643 = vmatprep.subr.bf16.mxu0 0
  %644 = vmatpush1.bf16.msra.mxu0 %v391
  %645 = vmatprep.subr.bf16.mxu0 0
  %646 = vmatpush1.bf16.msra.mxu0 %v390
  %647 = vmatprep.subr.bf16.mxu0 0
  %648 = vmatpush1.bf16.msra.mxu0 %v389
  %649 = vmatprep.subr.bf16.mxu0 0
  %650 = vmatpush1.bf16.msra.mxu0 %v388
  %651 = vmatprep.subr.bf16.mxu0 0
  %652 = vmatpush1.bf16.msra.mxu0 %v387
  %653 = vmatprep.subr.bf16.mxu0 0
  %654 = vmatpush1.bf16.msra.mxu0 %v386
  %655 = vmatprep.subr.bf16.mxu0 0
  %656 = vmatpush1.bf16.msra.mxu0 %v385
  %657 = vmatprep.subr.bf16.mxu0 0
  %658 = vmatpush2.bf16.msra.mxu0 %v400
  %659 = vmatprep.subr.bf16.mxu0 0
  %660 = vmatpush2.bf16.msra.mxu0 %v399
  %661 = vmatprep.subr.bf16.mxu0 0
  %662 = vmatpush2.bf16.msra.mxu0 %v398
  %663 = vmatprep.subr.bf16.mxu0 0
  %664 = vmatpush2.bf16.msra.mxu0 %v397
  %665 = vmatprep.subr.bf16.mxu0 0
  %666 = vmatpush2.bf16.msra.mxu0 %v396
  %667 = vmatprep.subr.bf16.mxu0 0
  %668 = vmatpush2.bf16.msra.mxu0 %v395
  %669 = vmatprep.subr.bf16.mxu0 0
  %670 = vmatpush2.bf16.msra.mxu0 %v394
  %671 = vmatprep.subr.bf16.mxu0 0
  %672 = vmatpush2.bf16.msra.mxu0 %v393
  %673 = vmatprep.mubr.bf16.mxu0 %v546
  %674 = vmatmul.mubr.bf16.gmra.mxu0 %v545
  %v675 = vpop.f32.mrf.mxu0
  %v676 = vadd.f32 %v116, %v675
  %v677 = vpop.f32.mrf.mxu0
  %v678 = vpop.f32.mrf.mxu0
  %v679 = vadd.f32 %v121, %v678
  %v680 = vpop.f32.mrf.mxu0
  %681 = vmatprep.mubr.bf16.mxu0 %v548
  %682 = vmatmul.mubr.bf16.gmra.mxu0 %v547
  %v683 = vpop.f32.mrf.mxu0
  %v684 = vadd.f32 %v126, %v683
  %v685 = vpop.f32.mrf.mxu0
  %v686 = vpop.f32.mrf.mxu0
  %v687 = vadd.f32 %v131, %v686
  %v688 = vpop.f32.mrf.mxu0
  %689 = vmatprep.mubr.bf16.mxu0 %v550
  %690 = vmatmul.mubr.bf16.gmra.mxu0 %v549
  %v691 = vpop.f32.mrf.mxu0
  %v692 = vadd.f32 %v136, %v691
  %v693 = vpop.f32.mrf.mxu0
  %v694 = vpop.f32.mrf.mxu0
  %v695 = vadd.f32 %v141, %v694
  %v696 = vpop.f32.mrf.mxu0
  %697 = vmatprep.mubr.bf16.mxu0 %v552
  %698 = vmatmul.mubr.bf16.gmra.mxu0 %v551
  %v699 = vpop.f32.mrf.mxu0
  %v700 = vadd.f32 %v146, %v699
  %v701 = vpop.f32.mrf.mxu0
  %v702 = vpop.f32.mrf.mxu0
  %v703 = vadd.f32 %v151, %v702
  %v704 = vpop.f32.mrf.mxu0
  %705 = vmatprep.mubr.bf16.mxu0 %v554
  %706 = vmatmul.mubr.bf16.gmra.mxu0 %v553
  %v707 = vpop.f32.mrf.mxu0
  %v708 = vadd.f32 %v156, %v707
  %v709 = vpop.f32.mrf.mxu0
  %v710 = vpop.f32.mrf.mxu0
  %v711 = vadd.f32 %v161, %v710
  %v712 = vpop.f32.mrf.mxu0
  %713 = vmatprep.mubr.bf16.mxu0 %v556
  %714 = vmatmul.mubr.bf16.gmra.mxu0 %v555
  %v715 = vpop.f32.mrf.mxu0
  %v716 = vadd.f32 %v166, %v715
  %v717 = vpop.f32.mrf.mxu0
  %v718 = vpop.f32.mrf.mxu0
  %v719 = vadd.f32 %v171, %v718
  %v720 = vpop.f32.mrf.mxu0
  %721 = vmatprep.mubr.bf16.mxu0 %v558
  %722 = vmatmul.mubr.bf16.gmra.mxu0 %v557
  %v723 = vpop.f32.mrf.mxu0
  %v724 = vadd.f32 %v176, %v723
  %v725 = vpop.f32.mrf.mxu0
  %v726 = vpop.f32.mrf.mxu0
  %v727 = vadd.f32 %v181, %v726
  %v728 = vpop.f32.mrf.mxu0
  %729 = vmatprep.mubr.bf16.mxu0 %v560
  %730 = vmatmul.mubr.bf16.gmra.mxu0 %v559
  %v731 = vpop.f32.mrf.mxu0
  %v732 = vadd.f32 %v186, %v731
  %v733 = vpop.f32.mrf.mxu0
  %v734 = vpop.f32.mrf.mxu0
  %v735 = vadd.f32 %v191, %v734
  %v736 = vpop.f32.mrf.mxu0
  %737 = vmatprep.mubr.bf16.mxu0 %v562
  %738 = vmatmul.mubr.bf16.gmra.mxu0 %v561
  %v739 = vpop.f32.mrf.mxu0
  %v740 = vadd.f32 %v196, %v739
  %v741 = vpop.f32.mrf.mxu0
  %v742 = vpop.f32.mrf.mxu0
  %v743 = vadd.f32 %v201, %v742
  %v744 = vpop.f32.mrf.mxu0
  %745 = vmatprep.mubr.bf16.mxu0 %v564
  %746 = vmatmul.mubr.bf16.gmra.mxu0 %v563
  %v747 = vpop.f32.mrf.mxu0
  %v748 = vadd.f32 %v206, %v747
  %v749 = vpop.f32.mrf.mxu0
  %v750 = vpop.f32.mrf.mxu0
  %v751 = vadd.f32 %v211, %v750
  %v752 = vpop.f32.mrf.mxu0
  %753 = vmatprep.mubr.bf16.mxu0 %v566
  %754 = vmatmul.mubr.bf16.gmra.mxu0 %v565
  %v755 = vpop.f32.mrf.mxu0
  %v756 = vadd.f32 %v216, %v755
  %v757 = vpop.f32.mrf.mxu0
  %v758 = vpop.f32.mrf.mxu0
  %v759 = vadd.f32 %v221, %v758
  %v760 = vpop.f32.mrf.mxu0
  %761 = vmatprep.mubr.bf16.mxu0 %v568
  %762 = vmatmul.mubr.bf16.gmra.mxu0 %v567
  %v763 = vpop.f32.mrf.mxu0
  %v764 = vadd.f32 %v226, %v763
  %v765 = vpop.f32.mrf.mxu0
  %v766 = vpop.f32.mrf.mxu0
  %v767 = vadd.f32 %v231, %v766
  %v768 = vpop.f32.mrf.mxu0
  %769 = vmatprep.mubr.bf16.mxu0 %v570
  %770 = vmatmul.mubr.bf16.gmra.mxu0 %v569
  %v771 = vpop.f32.mrf.mxu0
  %v772 = vadd.f32 %v236, %v771
  %v773 = vpop.f32.mrf.mxu0
  %v774 = vpop.f32.mrf.mxu0
  %v775 = vadd.f32 %v241, %v774
  %v776 = vpop.f32.mrf.mxu0
  %777 = vmatprep.mubr.bf16.mxu0 %v572
  %778 = vmatmul.mubr.bf16.gmra.mxu0 %v571
  %v779 = vpop.f32.mrf.mxu0
  %v780 = vadd.f32 %v246, %v779
  %v781 = vpop.f32.mrf.mxu0
  %v782 = vpop.f32.mrf.mxu0
  %v783 = vadd.f32 %v251, %v782
  %v784 = vpop.f32.mrf.mxu0
  %785 = vmatprep.mubr.bf16.mxu0 %v574
  %786 = vmatmul.mubr.bf16.gmra.mxu0 %v573
  %v787 = vpop.f32.mrf.mxu0
  %v788 = vadd.f32 %v256, %v787
  %v789 = vpop.f32.mrf.mxu0
  %v790 = vpop.f32.mrf.mxu0
  %v791 = vadd.f32 %v261, %v790
  %v792 = vpop.f32.mrf.mxu0
  %793 = vmatprep.mubr.bf16.mxu0 %v576
  %794 = vmatmul.mubr.bf16.gmra.mxu0 %v575
  %v795 = vpop.f32.mrf.mxu0
  %v796 = vadd.f32 %v266, %v795
  %v797 = vpop.f32.mrf.mxu0
  %v798 = vpop.f32.mrf.mxu0
  %v799 = vadd.f32 %v271, %v798
  %v800 = vpop.f32.mrf.mxu0
  %801 = vmatprep.mubr.bf16.mxu0 %v578
  %802 = vmatmul.mubr.bf16.gmra.mxu0 %v577
  %v803 = vpop.f32.mrf.mxu0
  %v804 = vadd.f32 %v276, %v803
  %v805 = vpop.f32.mrf.mxu0
  %v806 = vpop.f32.mrf.mxu0
  %v807 = vadd.f32 %v281, %v806
  %v808 = vpop.f32.mrf.mxu0
  %809 = vmatprep.mubr.bf16.mxu0 %v580
  %810 = vmatmul.mubr.bf16.gmra.mxu0 %v579
  %v811 = vpop.f32.mrf.mxu0
  %v812 = vadd.f32 %v286, %v811
  %v813 = vpop.f32.mrf.mxu0
  %v814 = vpop.f32.mrf.mxu0
  %v815 = vadd.f32 %v291, %v814
  %v816 = vpop.f32.mrf.mxu0
  %817 = vmatprep.mubr.bf16.mxu0 %v582
  %818 = vmatmul.mubr.bf16.gmra.mxu0 %v581
  %v819 = vpop.f32.mrf.mxu0
  %v820 = vadd.f32 %v296, %v819
  %v821 = vpop.f32.mrf.mxu0
  %v822 = vpop.f32.mrf.mxu0
  %v823 = vadd.f32 %v301, %v822
  %v824 = vpop.f32.mrf.mxu0
  %825 = vmatprep.mubr.bf16.mxu0 %v584
  %826 = vmatmul.mubr.bf16.gmra.mxu0 %v583
  %v827 = vpop.f32.mrf.mxu0
  %v828 = vadd.f32 %v306, %v827
  %v829 = vpop.f32.mrf.mxu0
  %v830 = vpop.f32.mrf.mxu0
  %v831 = vadd.f32 %v311, %v830
  %v832 = vpop.f32.mrf.mxu0
  %833 = vmatprep.mubr.bf16.mxu0 %v586
  %834 = vmatmul.mubr.bf16.gmra.mxu0 %v585
  %v835 = vpop.f32.mrf.mxu0
  %v836 = vadd.f32 %v316, %v835
  %v837 = vpop.f32.mrf.mxu0
  %v838 = vpop.f32.mrf.mxu0
  %v839 = vadd.f32 %v321, %v838
  %v840 = vpop.f32.mrf.mxu0
  %841 = vmatprep.mubr.bf16.mxu0 %v588
  %842 = vmatmul.mubr.bf16.gmra.mxu0 %v587
  %v843 = vpop.f32.mrf.mxu0
  %v844 = vadd.f32 %v326, %v843
  %v845 = vpop.f32.mrf.mxu0
  %v846 = vpop.f32.mrf.mxu0
  %v847 = vadd.f32 %v331, %v846
  %v848 = vpop.f32.mrf.mxu0
  %849 = vmatprep.mubr.bf16.mxu0 %v590
  %850 = vmatmul.mubr.bf16.gmra.mxu0 %v589
  %v851 = vpop.f32.mrf.mxu0
  %v852 = vadd.f32 %v336, %v851
  %v853 = vpop.f32.mrf.mxu0
  %v854 = vpop.f32.mrf.mxu0
  %v855 = vadd.f32 %v341, %v854
  %v856 = vpop.f32.mrf.mxu0
  %857 = vmatprep.mubr.bf16.mxu0 %v592
  %858 = vmatmul.mubr.bf16.gmra.mxu0 %v591
  %v859 = vpop.f32.mrf.mxu0
  %v860 = vadd.f32 %v346, %v859
  %v861 = vpop.f32.mrf.mxu0
  %v862 = vpop.f32.mrf.mxu0
  %v863 = vadd.f32 %v351, %v862
  %v864 = vpop.f32.mrf.mxu0
  %865 = vdwg.mxu0
  %vm866 = vcmask 130048
  %867 = vst.msk [vmem:[%s3] sm:$0xff] %vm866, %v676
  %868 = vst.msk [vmem:[%s3 + $0x8] sm:$0xff] %vm866, %v679
  %869 = vst.msk [vmem:[%s3 + $0x10] sm:$0xff] %vm866, %v684
  %870 = vst.msk [vmem:[%s3 + $0x18] sm:$0xff] %vm866, %v687
  %871 = vst.msk [vmem:[%s3 + $0x20] sm:$0xff] %vm866, %v692
  %872 = vst.msk [vmem:[%s3 + $0x28] sm:$0xff] %vm866, %v695
  %873 = vst.msk [vmem:[%s3 + $0x30] sm:$0xff] %vm866, %v700
  %874 = vst.msk [vmem:[%s3 + $0x38] sm:$0xff] %vm866, %v703
  %875 = vst.msk [vmem:[%s3 + $0x40] sm:$0xff] %vm866, %v708
  %876 = vst.msk [vmem:[%s3 + $0x48] sm:$0xff] %vm866, %v711
  %877 = vst.msk [vmem:[%s3 + $0x50] sm:$0xff] %vm866, %v716
  %878 = vst.msk [vmem:[%s3 + $0x58] sm:$0xff] %vm866, %v719
  %879 = vst.msk [vmem:[%s3 + $0x60] sm:$0xff] %vm866, %v724
  %880 = vst.msk [vmem:[%s3 + $0x68] sm:$0xff] %vm866, %v727
  %881 = vst.msk [vmem:[%s3 + $0x70] sm:$0xff] %vm866, %v732
  %882 = vst.msk [vmem:[%s3 + $0x78] sm:$0xff] %vm866, %v735
  %883 = vst.msk [vmem:[%s4] sm:$0xff] %vm866, %v740
  %884 = vst.msk [vmem:[%s4 + $0x8] sm:$0xff] %vm866, %v743
  %885 = vst.msk [vmem:[%s4 + $0x10] sm:$0xff] %vm866, %v748
  %886 = vst.msk [vmem:[%s4 + $0x18] sm:$0xff] %vm866, %v751
  %887 = vst.msk [vmem:[%s4 + $0x20] sm:$0xff] %vm866, %v756
  %888 = vst.msk [vmem:[%s4 + $0x28] sm:$0xff] %vm866, %v759
  %889 = vst.msk [vmem:[%s4 + $0x30] sm:$0xff] %vm866, %v764
  %890 = vst.msk [vmem:[%s4 + $0x38] sm:$0xff] %vm866, %v767
  %891 = vst.msk [vmem:[%s4 + $0x40] sm:$0xff] %vm866, %v772
  %892 = vst.msk [vmem:[%s4 + $0x48] sm:$0xff] %vm866, %v775
  %893 = vst.msk [vmem:[%s4 + $0x50] sm:$0xff] %vm866, %v780
  %894 = vst.msk [vmem:[%s4 + $0x58] sm:$0xff] %vm866, %v783
  %895 = vst.msk [vmem:[%s4 + $0x60] sm:$0xff] %vm866, %v788
  %896 = vst.msk [vmem:[%s4 + $0x68] sm:$0xff] %vm866, %v791
  %897 = vst.msk [vmem:[%s4 + $0x70] sm:$0xff] %vm866, %v796
  %898 = vst.msk [vmem:[%s4 + $0x78] sm:$0xff] %vm866, %v799
  %899 = vst.msk [vmem:[%s4 + $0x80] sm:$0xff] %vm866, %v804
  %900 = vst.msk [vmem:[%s4 + $0x88] sm:$0xff] %vm866, %v807
  %901 = vst.msk [vmem:[%s4 + $0x90] sm:$0xff] %vm866, %v812
  %902 = vst.msk [vmem:[%s4 + $0x98] sm:$0xff] %vm866, %v815
  %903 = vst.msk [vmem:[%s4 + $0xa0] sm:$0xff] %vm866, %v820
  %904 = vst.msk [vmem:[%s4 + $0xa8] sm:$0xff] %vm866, %v823
  %905 = vst.msk [vmem:[%s4 + $0xb0] sm:$0xff] %vm866, %v828
  %906 = vst.msk [vmem:[%s4 + $0xb8] sm:$0xff] %vm866, %v831
  %907 = vst.msk [vmem:[%s4 + $0xc0] sm:$0xff] %vm866, %v836
  %908 = vst.msk [vmem:[%s4 + $0xc8] sm:$0xff] %vm866, %v839
  %909 = vst.msk [vmem:[%s4 + $0xd0] sm:$0xff] %vm866, %v844
  %910 = vst.msk [vmem:[%s4 + $0xd8] sm:$0xff] %vm866, %v847
  %911 = vst.msk [vmem:[%s4 + $0xe0] sm:$0xff] %vm866, %v852
  %912 = vst.msk [vmem:[%s4 + $0xe8] sm:$0xff] %vm866, %v855
  %913 = vst.msk [vmem:[%s4 + $0xf0] sm:$0xff] %vm866, %v860
  %914 = vst.msk [vmem:[%s4 + $0xf8] sm:$0xff] %vm866, %v863
  %s915 = scalar_lea.vmem %s0, 256
  %v916 = vld [vmem:[%s915] sm:$0xff]
  %v917 = vld [vmem:[%s915 + $0x8] sm:$0xff]
  %v918 = vld [vmem:[%s915 + $0x10] sm:$0xff]
  %v919 = vld [vmem:[%s915 + $0x18] sm:$0xff]
  %v920 = vld [vmem:[%s915 + $0x20] sm:$0xff]
  %v921 = vld [vmem:[%s915 + $0x28] sm:$0xff]
  %v922 = vld [vmem:[%s915 + $0x30] sm:$0xff]
  %v923 = vld [vmem:[%s915 + $0x38] sm:$0xff]
  %v924 = vld [vmem:[%s915 + $0x40] sm:$0xff]
  %v925 = vld [vmem:[%s915 + $0x48] sm:$0xff]
  %v926 = vld [vmem:[%s915 + $0x50] sm:$0xff]
  %v927 = vld [vmem:[%s915 + $0x58] sm:$0xff]
  %v928 = vld [vmem:[%s915 + $0x60] sm:$0xff]
  %v929 = vld [vmem:[%s915 + $0x68] sm:$0xff]
  %v930 = vld [vmem:[%s915 + $0x70] sm:$0xff]
  %v931 = vld [vmem:[%s915 + $0x78] sm:$0xff]
  %v932 = vld [vmem:[%s915 + $0x80] sm:$0xff]
  %v933 = vld [vmem:[%s915 + $0x88] sm:$0xff]
  %v934 = vld [vmem:[%s915 + $0x90] sm:$0xff]
  %v935 = vld [vmem:[%s915 + $0x98] sm:$0xff]
  %v936 = vld [vmem:[%s915 + $0xa0] sm:$0xff]
  %v937 = vld [vmem:[%s915 + $0xa8] sm:$0xff]
  %v938 = vld [vmem:[%s915 + $0xb0] sm:$0xff]
  %v939 = vld [vmem:[%s915 + $0xb8] sm:$0xff]
  %v940 = vld [vmem:[%s915 + $0xc0] sm:$0xff]
  %v941 = vld [vmem:[%s915 + $0xc8] sm:$0xff]
  %v942 = vld [vmem:[%s915 + $0xd0] sm:$0xff]
  %v943 = vld [vmem:[%s915 + $0xd8] sm:$0xff]
  %v944 = vld [vmem:[%s915 + $0xe0] sm:$0xff]
  %v945 = vld [vmem:[%s915 + $0xe8] sm:$0xff]
  %v946 = vld [vmem:[%s915 + $0xf0] sm:$0xff]
  %v947 = vld [vmem:[%s915 + $0xf8] sm:$0xff]
  %v948 = vpack.c.bf16 %v917, %v916
  %v949 = vpack.c.bf16 %v919, %v918
  %v950 = vpack.c.bf16 %v921, %v920
  %v951 = vpack.c.bf16 %v923, %v922
  %v952 = vpack.c.bf16 %v925, %v924
  %v953 = vpack.c.bf16 %v927, %v926
  %v954 = vpack.c.bf16 %v929, %v928
  %v955 = vpack.c.bf16 %v931, %v930
  %v956 = vpack.c.bf16 %v933, %v932
  %v957 = vpack.c.bf16 %v935, %v934
  %v958 = vpack.c.bf16 %v937, %v936
  %v959 = vpack.c.bf16 %v939, %v938
  %v960 = vpack.c.bf16 %v941, %v940
  %v961 = vpack.c.bf16 %v943, %v942
  %v962 = vpack.c.bf16 %v945, %v944
  %v963 = vpack.c.bf16 %v947, %v946
  %964 = vmatprep.subr.bf16.mxu0 0
  %965 = vmatpush1.bf16.msra.mxu0 %v955
  %966 = vmatprep.subr.bf16.mxu0 0
  %967 = vmatpush1.bf16.msra.mxu0 %v954
  %968 = vmatprep.subr.bf16.mxu0 0
  %969 = vmatpush1.bf16.msra.mxu0 %v953
  %970 = vmatprep.subr.bf16.mxu0 0
  %971 = vmatpush1.bf16.msra.mxu0 %v952
  %972 = vmatprep.subr.bf16.mxu0 0
  %973 = vmatpush1.bf16.msra.mxu0 %v951
  %974 = vmatprep.subr.bf16.mxu0 0
  %975 = vmatpush1.bf16.msra.mxu0 %v950
  %976 = vmatprep.subr.bf16.mxu0 0
  %977 = vmatpush1.bf16.msra.mxu0 %v949
  %978 = vmatprep.subr.bf16.mxu0 0
  %979 = vmatpush1.bf16.msra.mxu0 %v948
  %980 = vmatprep.subr.bf16.mxu0 0
  %981 = vmatpush2.bf16.msra.mxu0 %v963
  %982 = vmatprep.subr.bf16.mxu0 0
  %983 = vmatpush2.bf16.msra.mxu0 %v962
  %984 = vmatprep.subr.bf16.mxu0 0
  %985 = vmatpush2.bf16.msra.mxu0 %v961
  %986 = vmatprep.subr.bf16.mxu0 0
  %987 = vmatpush2.bf16.msra.mxu0 %v960
  %988 = vmatprep.subr.bf16.mxu0 0
  %989 = vmatpush2.bf16.msra.mxu0 %v959
  %990 = vmatprep.subr.bf16.mxu0 0
  %991 = vmatpush2.bf16.msra.mxu0 %v958
  %992 = vmatprep.subr.bf16.mxu0 0
  %993 = vmatpush2.bf16.msra.mxu0 %v957
  %994 = vmatprep.subr.bf16.mxu0 0
  %995 = vmatpush2.bf16.msra.mxu0 %v956
  %996 = vmatprep.mubr.bf16.mxu0 %v546
  %997 = vmatmul.mubr.bf16.gmra.mxu0 %v545
  %v998 = vpop.f32.mrf.mxu0
  %v999 = vadd.f32 %v116, %v998
  %v1000 = vpop.f32.mrf.mxu0
  %v1001 = vpop.f32.mrf.mxu0
  %v1002 = vadd.f32 %v121, %v1001
  %v1003 = vpop.f32.mrf.mxu0
  %1004 = vmatprep.mubr.bf16.mxu0 %v548
  %1005 = vmatmul.mubr.bf16.gmra.mxu0 %v547
  %v1006 = vpop.f32.mrf.mxu0
  %v1007 = vadd.f32 %v126, %v1006
  %v1008 = vpop.f32.mrf.mxu0
  %v1009 = vpop.f32.mrf.mxu0
  %v1010 = vadd.f32 %v131, %v1009
  %v1011 = vpop.f32.mrf.mxu0
  %1012 = vmatprep.mubr.bf16.mxu0 %v550
  %1013 = vmatmul.mubr.bf16.gmra.mxu0 %v549
  %v1014 = vpop.f32.mrf.mxu0
  %v1015 = vadd.f32 %v136, %v1014
  %v1016 = vpop.f32.mrf.mxu0
  %v1017 = vpop.f32.mrf.mxu0
  %v1018 = vadd.f32 %v141, %v1017
  %v1019 = vpop.f32.mrf.mxu0
  %1020 = vmatprep.mubr.bf16.mxu0 %v552
  %1021 = vmatmul.mubr.bf16.gmra.mxu0 %v551
  %v1022 = vpop.f32.mrf.mxu0
  %v1023 = vadd.f32 %v146, %v1022
  %v1024 = vpop.f32.mrf.mxu0
  %v1025 = vpop.f32.mrf.mxu0
  %v1026 = vadd.f32 %v151, %v1025
  %v1027 = vpop.f32.mrf.mxu0
  %1028 = vmatprep.mubr.bf16.mxu0 %v554
  %1029 = vmatmul.mubr.bf16.gmra.mxu0 %v553
  %v1030 = vpop.f32.mrf.mxu0
  %v1031 = vadd.f32 %v156, %v1030
  %v1032 = vpop.f32.mrf.mxu0
  %v1033 = vpop.f32.mrf.mxu0
  %v1034 = vadd.f32 %v161, %v1033
  %v1035 = vpop.f32.mrf.mxu0
  %1036 = vmatprep.mubr.bf16.mxu0 %v556
  %1037 = vmatmul.mubr.bf16.gmra.mxu0 %v555
  %v1038 = vpop.f32.mrf.mxu0
  %v1039 = vadd.f32 %v166, %v1038
  %v1040 = vpop.f32.mrf.mxu0
  %v1041 = vpop.f32.mrf.mxu0
  %v1042 = vadd.f32 %v171, %v1041
  %v1043 = vpop.f32.mrf.mxu0
  %1044 = vmatprep.mubr.bf16.mxu0 %v558
  %1045 = vmatmul.mubr.bf16.gmra.mxu0 %v557
  %v1046 = vpop.f32.mrf.mxu0
  %v1047 = vadd.f32 %v176, %v1046
  %v1048 = vpop.f32.mrf.mxu0
  %v1049 = vpop.f32.mrf.mxu0
  %v1050 = vadd.f32 %v181, %v1049
  %v1051 = vpop.f32.mrf.mxu0
  %1052 = vmatprep.mubr.bf16.mxu0 %v560
  %1053 = vmatmul.mubr.bf16.gmra.mxu0 %v559
  %v1054 = vpop.f32.mrf.mxu0
  %v1055 = vadd.f32 %v186, %v1054
  %v1056 = vpop.f32.mrf.mxu0
  %v1057 = vpop.f32.mrf.mxu0
  %v1058 = vadd.f32 %v191, %v1057
  %v1059 = vpop.f32.mrf.mxu0
  %1060 = vmatprep.mubr.bf16.mxu0 %v562
  %1061 = vmatmul.mubr.bf16.gmra.mxu0 %v561
  %v1062 = vpop.f32.mrf.mxu0
  %v1063 = vadd.f32 %v196, %v1062
  %v1064 = vpop.f32.mrf.mxu0
  %v1065 = vpop.f32.mrf.mxu0
  %v1066 = vadd.f32 %v201, %v1065
  %v1067 = vpop.f32.mrf.mxu0
  %1068 = vmatprep.mubr.bf16.mxu0 %v564
  %1069 = vmatmul.mubr.bf16.gmra.mxu0 %v563
  %v1070 = vpop.f32.mrf.mxu0
  %v1071 = vadd.f32 %v206, %v1070
  %v1072 = vpop.f32.mrf.mxu0
  %v1073 = vpop.f32.mrf.mxu0
  %v1074 = vadd.f32 %v211, %v1073
  %v1075 = vpop.f32.mrf.mxu0
  %1076 = vmatprep.mubr.bf16.mxu0 %v566
  %1077 = vmatmul.mubr.bf16.gmra.mxu0 %v565
  %v1078 = vpop.f32.mrf.mxu0
  %v1079 = vadd.f32 %v216, %v1078
  %v1080 = vpop.f32.mrf.mxu0
  %v1081 = vpop.f32.mrf.mxu0
  %v1082 = vadd.f32 %v221, %v1081
  %v1083 = vpop.f32.mrf.mxu0
  %1084 = vmatprep.mubr.bf16.mxu0 %v568
  %1085 = vmatmul.mubr.bf16.gmra.mxu0 %v567
  %v1086 = vpop.f32.mrf.mxu0
  %v1087 = vadd.f32 %v226, %v1086
  %v1088 = vpop.f32.mrf.mxu0
  %v1089 = vpop.f32.mrf.mxu0
  %v1090 = vadd.f32 %v231, %v1089
  %v1091 = vpop.f32.mrf.mxu0
  %1092 = vmatprep.mubr.bf16.mxu0 %v570
  %1093 = vmatmul.mubr.bf16.gmra.mxu0 %v569
  %v1094 = vpop.f32.mrf.mxu0
  %v1095 = vadd.f32 %v236, %v1094
  %v1096 = vpop.f32.mrf.mxu0
  %v1097 = vpop.f32.mrf.mxu0
  %v1098 = vadd.f32 %v241, %v1097
  %v1099 = vpop.f32.mrf.mxu0
  %1100 = vmatprep.mubr.bf16.mxu0 %v572
  %1101 = vmatmul.mubr.bf16.gmra.mxu0 %v571
  %v1102 = vpop.f32.mrf.mxu0
  %v1103 = vadd.f32 %v246, %v1102
  %v1104 = vpop.f32.mrf.mxu0
  %v1105 = vpop.f32.mrf.mxu0
  %v1106 = vadd.f32 %v251, %v1105
  %v1107 = vpop.f32.mrf.mxu0
  %1108 = vmatprep.mubr.bf16.mxu0 %v574
  %1109 = vmatmul.mubr.bf16.gmra.mxu0 %v573
  %v1110 = vpop.f32.mrf.mxu0
  %v1111 = vadd.f32 %v256, %v1110
  %v1112 = vpop.f32.mrf.mxu0
  %v1113 = vpop.f32.mrf.mxu0
  %v1114 = vadd.f32 %v261, %v1113
  %v1115 = vpop.f32.mrf.mxu0
  %1116 = vmatprep.mubr.bf16.mxu0 %v576
  %1117 = vmatmul.mubr.bf16.gmra.mxu0 %v575
  %v1118 = vpop.f32.mrf.mxu0
  %v1119 = vadd.f32 %v266, %v1118
  %v1120 = vpop.f32.mrf.mxu0
  %v1121 = vpop.f32.mrf.mxu0
  %v1122 = vadd.f32 %v271, %v1121
  %v1123 = vpop.f32.mrf.mxu0
  %1124 = vmatprep.mubr.bf16.mxu0 %v578
  %1125 = vmatmul.mubr.bf16.gmra.mxu0 %v577
  %v1126 = vpop.f32.mrf.mxu0
  %v1127 = vadd.f32 %v276, %v1126
  %v1128 = vpop.f32.mrf.mxu0
  %v1129 = vpop.f32.mrf.mxu0
  %v1130 = vadd.f32 %v281, %v1129
  %v1131 = vpop.f32.mrf.mxu0
  %1132 = vmatprep.mubr.bf16.mxu0 %v580
  %1133 = vmatmul.mubr.bf16.gmra.mxu0 %v579
  %v1134 = vpop.f32.mrf.mxu0
  %v1135 = vadd.f32 %v286, %v1134
  %v1136 = vpop.f32.mrf.mxu0
  %v1137 = vpop.f32.mrf.mxu0
  %v1138 = vadd.f32 %v291, %v1137
  %v1139 = vpop.f32.mrf.mxu0
  %1140 = vmatprep.mubr.bf16.mxu0 %v582
  %1141 = vmatmul.mubr.bf16.gmra.mxu0 %v581
  %v1142 = vpop.f32.mrf.mxu0
  %v1143 = vadd.f32 %v296, %v1142
  %v1144 = vpop.f32.mrf.mxu0
  %v1145 = vpop.f32.mrf.mxu0
  %v1146 = vadd.f32 %v301, %v1145
  %v1147 = vpop.f32.mrf.mxu0
  %1148 = vmatprep.mubr.bf16.mxu0 %v584
  %1149 = vmatmul.mubr.bf16.gmra.mxu0 %v583
  %v1150 = vpop.f32.mrf.mxu0
  %v1151 = vadd.f32 %v306, %v1150
  %v1152 = vpop.f32.mrf.mxu0
  %v1153 = vpop.f32.mrf.mxu0
  %v1154 = vadd.f32 %v311, %v1153
  %v1155 = vpop.f32.mrf.mxu0
  %1156 = vmatprep.mubr.bf16.mxu0 %v586
  %1157 = vmatmul.mubr.bf16.gmra.mxu0 %v585
  %v1158 = vpop.f32.mrf.mxu0
  %v1159 = vadd.f32 %v316, %v1158
  %v1160 = vpop.f32.mrf.mxu0
  %v1161 = vpop.f32.mrf.mxu0
  %v1162 = vadd.f32 %v321, %v1161
  %v1163 = vpop.f32.mrf.mxu0
  %1164 = vmatprep.mubr.bf16.mxu0 %v588
  %1165 = vmatmul.mubr.bf16.gmra.mxu0 %v587
  %v1166 = vpop.f32.mrf.mxu0
  %v1167 = vadd.f32 %v326, %v1166
  %v1168 = vpop.f32.mrf.mxu0
  %v1169 = vpop.f32.mrf.mxu0
  %v1170 = vadd.f32 %v331, %v1169
  %v1171 = vpop.f32.mrf.mxu0
  %1172 = vmatprep.mubr.bf16.mxu0 %v590
  %1173 = vmatmul.mubr.bf16.gmra.mxu0 %v589
  %v1174 = vpop.f32.mrf.mxu0
  %v1175 = vadd.f32 %v336, %v1174
  %v1176 = vpop.f32.mrf.mxu0
  %v1177 = vpop.f32.mrf.mxu0
  %v1178 = vadd.f32 %v341, %v1177
  %v1179 = vpop.f32.mrf.mxu0
  %1180 = vmatprep.mubr.bf16.mxu0 %v592
  %1181 = vmatmul.mubr.bf16.gmra.mxu0 %v591
  %v1182 = vpop.f32.mrf.mxu0
  %v1183 = vadd.f32 %v346, %v1182
  %v1184 = vpop.f32.mrf.mxu0
  %v1185 = vpop.f32.mrf.mxu0
  %v1186 = vadd.f32 %v351, %v1185
  %v1187 = vpop.f32.mrf.mxu0
  %1188 = vdwg.mxu0
  %s1189 = scalar_lea.vmem %s3, 128
  %1190 = vst.msk [vmem:[%s1189] sm:$0xff] %vm866, %v999
  %1191 = vst.msk [vmem:[%s1189 + $0x8] sm:$0xff] %vm866, %v1002
  %1192 = vst.msk [vmem:[%s1189 + $0x10] sm:$0xff] %vm866, %v1007
  %1193 = vst.msk [vmem:[%s1189 + $0x18] sm:$0xff] %vm866, %v1010
  %1194 = vst.msk [vmem:[%s1189 + $0x20] sm:$0xff] %vm866, %v1015
  %1195 = vst.msk [vmem:[%s1189 + $0x28] sm:$0xff] %vm866, %v1018
  %1196 = vst.msk [vmem:[%s1189 + $0x30] sm:$0xff] %vm866, %v1023
  %1197 = vst.msk [vmem:[%s1189 + $0x38] sm:$0xff] %vm866, %v1026
  %1198 = vst.msk [vmem:[%s1189 + $0x40] sm:$0xff] %vm866, %v1031
  %1199 = vst.msk [vmem:[%s1189 + $0x48] sm:$0xff] %vm866, %v1034
  %1200 = vst.msk [vmem:[%s1189 + $0x50] sm:$0xff] %vm866, %v1039
  %1201 = vst.msk [vmem:[%s1189 + $0x58] sm:$0xff] %vm866, %v1042
  %1202 = vst.msk [vmem:[%s1189 + $0x60] sm:$0xff] %vm866, %v1047
  %1203 = vst.msk [vmem:[%s1189 + $0x68] sm:$0xff] %vm866, %v1050
  %1204 = vst.msk [vmem:[%s1189 + $0x70] sm:$0xff] %vm866, %v1055
  %1205 = vst.msk [vmem:[%s1189 + $0x78] sm:$0xff] %vm866, %v1058
  %s1206 = scalar_lea.vmem %s4, 256
  %1207 = vst.msk [vmem:[%s1206] sm:$0xff] %vm866, %v1063
  %1208 = vst.msk [vmem:[%s1206 + $0x8] sm:$0xff] %vm866, %v1066
  %1209 = vst.msk [vmem:[%s1206 + $0x10] sm:$0xff] %vm866, %v1071
  %1210 = vst.msk [vmem:[%s1206 + $0x18] sm:$0xff] %vm866, %v1074
  %1211 = vst.msk [vmem:[%s1206 + $0x20] sm:$0xff] %vm866, %v1079
  %1212 = vst.msk [vmem:[%s1206 + $0x28] sm:$0xff] %vm866, %v1082
  %1213 = vst.msk [vmem:[%s1206 + $0x30] sm:$0xff] %vm866, %v1087
  %1214 = vst.msk [vmem:[%s1206 + $0x38] sm:$0xff] %vm866, %v1090
  %1215 = vst.msk [vmem:[%s1206 + $0x40] sm:$0xff] %vm866, %v1095
  %1216 = vst.msk [vmem:[%s1206 + $0x48] sm:$0xff] %vm866, %v1098
  %1217 = vst.msk [vmem:[%s1206 + $0x50] sm:$0xff] %vm866, %v1103
  %1218 = vst.msk [vmem:[%s1206 + $0x58] sm:$0xff] %vm866, %v1106
  %1219 = vst.msk [vmem:[%s1206 + $0x60] sm:$0xff] %vm866, %v1111
  %1220 = vst.msk [vmem:[%s1206 + $0x68] sm:$0xff] %vm866, %v1114
  %1221 = vst.msk [vmem:[%s1206 + $0x70] sm:$0xff] %vm866, %v1119
  %1222 = vst.msk [vmem:[%s1206 + $0x78] sm:$0xff] %vm866, %v1122
  %1223 = vst.msk [vmem:[%s1206 + $0x80] sm:$0xff] %vm866, %v1127
  %1224 = vst.msk [vmem:[%s1206 + $0x88] sm:$0xff] %vm866, %v1130
  %1225 = vst.msk [vmem:[%s1206 + $0x90] sm:$0xff] %vm866, %v1135
  %1226 = vst.msk [vmem:[%s1206 + $0x98] sm:$0xff] %vm866, %v1138
  %1227 = vst.msk [vmem:[%s1206 + $0xa0] sm:$0xff] %vm866, %v1143
  %1228 = vst.msk [vmem:[%s1206 + $0xa8] sm:$0xff] %vm866, %v1146
  %1229 = vst.msk [vmem:[%s1206 + $0xb0] sm:$0xff] %vm866, %v1151
  %1230 = vst.msk [vmem:[%s1206 + $0xb8] sm:$0xff] %vm866, %v1154
  %1231 = vst.msk [vmem:[%s1206 + $0xc0] sm:$0xff] %vm866, %v1159
  %1232 = vst.msk [vmem:[%s1206 + $0xc8] sm:$0xff] %vm866, %v1162
  %1233 = vst.msk [vmem:[%s1206 + $0xd0] sm:$0xff] %vm866, %v1167
  %1234 = vst.msk [vmem:[%s1206 + $0xd8] sm:$0xff] %vm866, %v1170
  %1235 = vst.msk [vmem:[%s1206 + $0xe0] sm:$0xff] %vm866, %v1175
  %1236 = vst.msk [vmem:[%s1206 + $0xe8] sm:$0xff] %vm866, %v1178
  %1237 = vst.msk [vmem:[%s1206 + $0xf0] sm:$0xff] %vm866, %v1183
  %1238 = vst.msk [vmem:[%s1206 + $0xf8] sm:$0xff] %vm866, %v1186
  // Predicated region
  $region14: #{spatial_key_value.1} parent=0 // pred_check
    _
  $region15: #{spatial_key_value.1} parent=0 // pred_check_branch
    %1240 = sbr.rel (0) target = $region17
  $region16: #{spatial_key_value.1} parent=0 // pred_region
    _
  $region17: #{spatial_key_value.1} parent=0 // pred_fallthru
    _
  // Predicated region
  $region18: #{spatial_key_value.1} parent=0 // pred_check
    _
  $region19: #{spatial_key_value.1} parent=0 // pred_check_branch
    %1242 = sbr.rel (0) target = $region21
  $region20: #{spatial_key_value.1} parent=0 // pred_region
    _
  $region21: #{spatial_key_value.1} parent=0 // pred_fallthru
    _
  // Predicated region
  $region22: #{spatial_key_value.1} parent=0 // pred_check
    _
  $region23: #{spatial_key_value.1} parent=0 // pred_check_branch
    %1244 = sbr.rel (0) target = $region25
  $region24: #{spatial_key_value.1} parent=0 // pred_region
    _
  $region25: #{spatial_key_value.1} parent=0 // pred_fallthru
    _
  // Predicated region
  $region26: #{spatial_key_value.1} parent=0 // pred_check
    _
  $region27: #{spatial_key_value.1} parent=0 // pred_check_branch
    %1246 = sbr.rel (0) target = $region29
  $region28: #{spatial_key_value.1} parent=0 // pred_region
    _
  $region29: #{spatial_key_value.1} parent=0 // pred_fallthru
    _

</llo_original>
